<compile_context>
chip_gen: v7x
topology: tpu7x:2x2x1
jax: 0.10.0
libtpu: 0.0.40
codegen_flags: <defaults>
</compile_context>

<pallas_src>
import functools
import math

import jax
import jax.numpy as jnp
from jax.experimental import pallas as pl
from jax.experimental.pallas import tpu as pltpu


# ---------------------------------------------------------------------------
# Kernel
# ---------------------------------------------------------------------------
def _residual_kernel(x_ref, w1_ref, b1_ref, w2_ref, b2_ref, out_ref, *, add):
    """Fused Residual on one block of B_blk images.

    x_ref / out_ref : (B_blk, H, WC) bf16      (WC = W * C_pad, lane-dense)
    w*_ref          : (3*WC, WC) bf16          (banded weights, K-concatenated row taps)
    b*_ref          : (1, WC) f32              (folded BN bias, tiled over W)
    """
    b_imgs, h, wc = x_ref.shape
    m = b_imgs * h
    x = x_ref[...].reshape(m, wc)                                   # (M, WC) bf16

    if b_imgs > 1:
        # Within-image row index (iota over the H axis, then flatten -- no modulo).
        r = jax.lax.broadcasted_iota(jnp.int32, (b_imgs, h, wc), 1).reshape(m, wc)
        top = r == 0
        bot = r == h - 1
    else:
        top = bot = None

    def row_above(v):
        # s[i] = v[i-1] within each image; zero on each image's first row.
        s = jnp.concatenate([jnp.zeros((1, wc), v.dtype), v[: m - 1]], axis=0)
        return jnp.where(top, jnp.zeros_like(s), s) if top is not None else s

    def row_below(v):
        # s[i] = v[i+1] within each image; zero on each image's last row.
        s = jnp.concatenate([v[1:], jnp.zeros((1, wc), v.dtype)], axis=0)
        return jnp.where(bot, jnp.zeros_like(s), s) if bot is not None else s

    def conv3x3_bn_silu(v, w_ref, b_ref):
        # Single MXU push per conv: (M, 3*WC) x (3*WC, WC) with f32 accumulation.
        lhs = jnp.concatenate([row_above(v), v, row_below(v)], axis=1)
        y = jnp.dot(lhs, w_ref[...], preferred_element_type=jnp.float32)
        y = y + b_ref[...]                              # implicit (1, WC) broadcast
        return y * jax.nn.sigmoid(y)                    # SiLU in f32 (EUP)

    y1 = conv3x3_bn_silu(x, w1_ref, b1_ref)
    y2 = conv3x3_bn_silu(y1.astype(jnp.bfloat16), w2_ref, b2_ref)
    if add:
        y2 = y2 + x.astype(jnp.float32)                 # residual add in f32
    out_ref[...] = y2.astype(out_ref.dtype).reshape(b_imgs, h, wc)


# ---------------------------------------------------------------------------
# Host-side parameter preparation
# ---------------------------------------------------------------------------
def _fold_bn(w_oihw, gamma, beta, mean, var, eps):
    """Fold inference-mode BatchNorm into the conv weight (OIHW) and a bias."""
    scale = gamma / jnp.sqrt(var + eps)                       # (Cout,)
    w_hwio = jnp.transpose(w_oihw * scale[:, None, None, None], (2, 3, 1, 0))
    bias = beta - mean * scale
    return w_hwio.astype(jnp.float32), bias.astype(jnp.float32)


def _pad_channels(w_hwio, bias, c_pad):
    """Zero-pad input/output channels of a (3,3,C,C) HWIO weight and its bias."""
    c = w_hwio.shape[-1]
    if c_pad == c:
        return w_hwio, bias
    p = c_pad - c
    return (jnp.pad(w_hwio, ((0, 0), (0, 0), (0, p), (0, p))),
            jnp.pad(bias, ((0, p),)))


def _band_cat_weights(w_hwio, width):
    """(3,3,Cp,Cp) HWIO weights -> (3*W*Cp, W*Cp) block-banded weight.

    band[dy][(w+dx-1)*Cp + ci, w*Cp + co] = w_hwio[dy, dx, ci, co]; the eye(k=1-dx)
    clipping implements SAME zero-padding along width.  Row blocks are ordered
    [input row h-1; h; h+1] to match the kernel's [row_above | x | row_below] LHS.
    """
    mats = [
        sum(jnp.kron(jnp.eye(width, k=1 - dx, dtype=jnp.float32), w_hwio[dy, dx])
            for dx in range(3))
        for dy in range(3)
    ]
    return jnp.concatenate(mats, axis=0)


def _choose_batch_block(n, h):
    """Images per grid step: target M = b*h >= 128 for MXU fill, but keep >= 2 grid
    steps when n >= 2 so both v7x TensorCores get work."""
    b = min(n, max(1, -(-128 // h)))
    if n >= 2:
        b = min(b, max(1, n // 2))
    while n % b:
        b -= 1
    return b


def _vmem_capacity_bytes():
    """Generation-aware VMEM capacity (falls back to v7x's 64 MiB per TensorCore)."""
    try:
        return int(pltpu.get_tpu_info().vmem_capacity_bytes)
    except Exception:
        return 64 << 20


# ---------------------------------------------------------------------------
# Wrappers
# ---------------------------------------------------------------------------
def residual_forward_nhwc(x_nhwc, params, *, add=True, bn_eps=1e-3):
    """Residual.forward on NHWC input (the transpose-free hot path).  Returns NHWC bf16."""
    n, h, w, c = x_nhwc.shape
    p1, p2 = params

    # Zero-pad channels so the lane dim W*Cp is a multiple of 128 (only when cheap).
    c_pad = c
    if (w * c) % 128:
        step = 128 // math.gcd(w, 128)
        cand = ((c + step - 1) // step) * step
        if cand <= max(8, 2 * c):
            c_pad = cand
    wc = w * c_pad

    w1_hwio, b1 = _pad_channels(*_fold_bn(*p1, bn_eps), c_pad)
    w2_hwio, b2 = _pad_channels(*_fold_bn(*p2, bn_eps), c_pad)
    w1_cat = _band_cat_weights(w1_hwio, w).astype(jnp.bfloat16)      # (3*WC, WC)
    w2_cat = _band_cat_weights(w2_hwio, w).astype(jnp.bfloat16)
    b1_row = jnp.tile(b1, w).reshape(1, wc).astype(jnp.float32)      # b_row[w*Cp+c] = b[c]
    b2_row = jnp.tile(b2, w).reshape(1, wc).astype(jnp.float32)

    x_p = x_nhwc if c_pad == c else jnp.pad(
        x_nhwc, ((0, 0), (0, 0), (0, 0), (0, c_pad - c)))
    x_flat = x_p.reshape(n, h, wc).astype(jnp.bfloat16)              # lane-dense bf16

    b_blk = _choose_batch_block(n, h)
    grid = (n // b_blk,)

    bf16, f32 = 2, 4
    footprint = (2 * 2 * (b_blk * h * wc * bf16)       # x + out blocks (double buffered)
                 + 2 * 2 * (3 * wc * wc * bf16)        # two weight sets (x2 buffers)
                 + 2 * 2 * (wc * f32)                  # two bias rows (x2 buffers)
                 + 6 * (b_blk * h * wc * f32))         # in-kernel value temporaries
    cap = _vmem_capacity_bytes()
    vmem_limit = int(min(footprint + (32 << 20), cap - (cap // 4)))

    cost = pl.CostEstimate(
        flops=2 * 2 * n * h * (3 * wc) * wc,           # 2 convs, one (M,3WC)x(3WC,WC) each
        transcendentals=2 * n * h * wc,                # two SiLUs
        bytes_accessed=2 * n * h * wc * bf16 + 2 * (3 * wc * wc * bf16 + wc * f32),
    )

    kernel = functools.partial(_residual_kernel, add=add)

    out_flat = pl.pallas_call(
        kernel,
        out_shape=jax.ShapeDtypeStruct((n, h, wc), jnp.bfloat16),
        grid_spec=pltpu.PrefetchScalarGridSpec(
            num_scalar_prefetch=0,
            grid=grid,
            in_specs=[
                pl.BlockSpec((b_blk, h, wc), lambda i: (i, 0, 0)),
                # Weight / bias index maps are constant (resident across the grid).
                pl.BlockSpec((3 * wc, wc), lambda i: (0, 0)),
                pl.BlockSpec((1, wc), lambda i: (0, 0)),
                pl.BlockSpec((3 * wc, wc), lambda i: (0, 0)),
                pl.BlockSpec((1, wc), lambda i: (0, 0)),
            ],
            out_specs=pl.BlockSpec((b_blk, h, wc), lambda i: (i, 0, 0)),
        ),
        compiler_params=pltpu.CompilerParams(
            dimension_semantics=("parallel",),         # image blocks -> both v7x cores
            vmem_limit_bytes=vmem_limit,
        ),
        cost_estimate=cost,
    )(x_flat, w1_cat, b1_row, w2_cat, b2_row)

    out = out_flat.reshape(n, h, w, c_pad)
    return out[..., :c] if c_pad != c else out


def residual_forward(x_nchw, params, *, add=True, bn_eps=1e-3):
    """PyTorch-parity wrapper (NCHW in / NCHW out, bf16 output).

    The NCHW<->NHWC transposes only exist for torch interface parity; in an NHWC
    end-to-end model call residual_forward_nhwc directly.
    """
    x_nhwc = jnp.transpose(x_nchw, (0, 2, 3, 1))
    out_nhwc = residual_forward_nhwc(x_nhwc, params, add=add, bn_eps=bn_eps)
    return jnp.transpose(out_nhwc, (0, 3, 1, 2))


# ---------------------------------------------------------------------------
# Test harness
# ---------------------------------------------------------------------------
def _make_params(key, ch):
    """Deterministic synthetic parameters for the two ConvBlocks."""
    ks = jax.random.split(key, 10)

    def convblock(kw, kg, kb, km, kv):
        w = jax.random.normal(kw, (ch, ch, 3, 3), jnp.float32) * 0.1   # OIHW (torch)
        gamma = 1.0 + 0.1 * jax.random.normal(kg, (ch,), jnp.float32)
        beta = 0.1 * jax.random.normal(kb, (ch,), jnp.float32)
        mean = 0.05 * jax.random.normal(km, (ch,), jnp.float32)
        var = 1.0 + 0.1 * jax.random.uniform(kv, (ch,), jnp.float32)
        return (w, gamma, beta, mean, var)

    return (convblock(*ks[0:5]), convblock(*ks[5:10]))


def _reference(x_nchw, params, *, add=True, bn_eps=1e-3):
    """Pure-JAX reference (lax.conv), quantised at the same bf16 points as the kernel."""
    x = jnp.transpose(x_nchw, (0, 2, 3, 1)).astype(jnp.bfloat16).astype(jnp.float32)

    def block(hin, p):
        w_hwio, b = _fold_bn(*p, bn_eps)
        w_hwio = w_hwio.astype(jnp.bfloat16).astype(jnp.float32)
        y = jax.lax.conv_general_dilated(
            hin, w_hwio, window_strides=(1, 1), padding="SAME",
            dimension_numbers=("NHWC", "HWIO", "NHWC"),
            precision=jax.lax.Precision.HIGHEST)
        y = y + b
        return y * jax.nn.sigmoid(y)

    y1 = block(x, params[0]).astype(jnp.bfloat16).astype(jnp.float32)
    y2 = block(y1, params[1])
    if add:
        y2 = y2 + x
    return jnp.transpose(y2, (0, 3, 1, 2))


if __name__ == "__main__":
    key = jax.random.PRNGKey(0)
    k_x, k_p, k_x2 = jax.random.split(key, 3)

    N, C, H, W = 2, 4, 16, 16
    x = jax.random.normal(k_x, (N, C, H, W), jnp.float32)
    params = _make_params(k_p, C)

    out = jax.block_until_ready(residual_forward(x, params, add=True))
    assert out.shape == (N, C, H, W)
    ref = _reference(x, params, add=True)
    err = float(jnp.max(jnp.abs(out.astype(jnp.float32) - ref)))
    assert jnp.allclose(out.astype(jnp.float32), ref, atol=2e-2, rtol=2e-2), (
        f"mismatch vs reference (max abs err {err})")

    # add=False path.
    out_na = jax.block_until_ready(residual_forward(x, params, add=False))
    ref_na = _reference(x, params, add=False)
    assert jnp.allclose(out_na.astype(jnp.float32), ref_na, atol=2e-2, rtol=2e-2), \
        "mismatch vs reference (add=False)"

    # Multi-image-per-grid-step path: N=16 -> B_blk=8 -> M=128 rows per matmul, grid=(2,).
    N2 = 16
    x2 = jax.random.normal(k_x2, (N2, C, H, W), jnp.float32)
    out2 = jax.block_until_ready(residual_forward(x2, params, add=True))
    ref2 = _reference(x2, params, add=True)
    err2 = float(jnp.max(jnp.abs(out2.astype(jnp.float32) - ref2)))
    assert jnp.allclose(out2.astype(jnp.float32), ref2, atol=2e-2, rtol=2e-2), (
        f"batched-path mismatch vs reference (max abs err {err2})")

    print("KERNEL_OK")
</pallas_src>

<mosaic_0001>
module attributes {stable_mosaic.version = 11 : i64} {
  func.func @_residual_kernel(%arg0: i32, %arg1: memref<1x16x128xbf16, #tpu.memory_space<vmem>>, %arg2: memref<384x128xbf16, #tpu.memory_space<vmem>>, %arg3: memref<1x128xf32, #tpu.memory_space<vmem>>, %arg4: memref<384x128xbf16, #tpu.memory_space<vmem>>, %arg5: memref<1x128xf32, #tpu.memory_space<vmem>>, %arg6: memref<1x16x128xbf16, #tpu.memory_space<vmem>>) attributes {dimension_semantics = [#tpu.dimension_semantics<parallel>], iteration_bounds = array<i64: 2>, scalar_prefetch = 0 : i64, scratch_operands = 0 : i64, tpu.core_type = #tpu.core_type<tc>, window_params = [{transform_indices = @transform_0, window_bounds = array<i64: 1, 16, 128>}, {pipeline_mode = #tpu.pipeline_mode<synchronous>, transform_indices = @transform_1, window_bounds = array<i64: 384, 128>}, {pipeline_mode = #tpu.pipeline_mode<synchronous>, transform_indices = @transform_2, window_bounds = array<i64: 1, 128>}, {pipeline_mode = #tpu.pipeline_mode<synchronous>, transform_indices = @transform_3, window_bounds = array<i64: 384, 128>}, {pipeline_mode = #tpu.pipeline_mode<synchronous>, transform_indices = @transform_4, window_bounds = array<i64: 1, 128>}, {transform_indices = @transform_5, window_bounds = array<i64: 1, 16, 128>}]} {
    %c0 = arith.constant 0 : index
    %c0_0 = arith.constant 0 : index
    %c0_1 = arith.constant 0 : index
    %0 = vector.load %arg1[%c0, %c0_0, %c0_1] : memref<1x16x128xbf16, #tpu.memory_space<vmem>>, vector<1x16x128xbf16>
    %1 = vector.shape_cast %0 : vector<1x16x128xbf16> to vector<16x128xbf16>
    %cst = arith.constant 0.000000e+00 : bf16
    %2 = vector.broadcast %cst : bf16 to vector<1x128xbf16>
    %3 = vector.extract_strided_slice %1 {offsets = [0, 0], sizes = [15, 128], strides = [1, 1]} : vector<16x128xbf16> to vector<15x128xbf16>
    %4 = tpu.concatenate %2, %3 in 0 : vector<1x128xbf16>, vector<15x128xbf16> -> vector<16x128xbf16>
    %5 = vector.extract_strided_slice %1 {offsets = [1, 0], sizes = [15, 128], strides = [1, 1]} : vector<16x128xbf16> to vector<15x128xbf16>
    %cst_2 = arith.constant 0.000000e+00 : bf16
    %6 = vector.broadcast %cst_2 : bf16 to vector<1x128xbf16>
    %7 = tpu.concatenate %5, %6 in 0 : vector<15x128xbf16>, vector<1x128xbf16> -> vector<16x128xbf16>
    %8 = tpu.concatenate %4, %1, %7 in 1 : vector<16x128xbf16>, vector<16x128xbf16>, vector<16x128xbf16> -> vector<16x384xbf16>
    %c0_3 = arith.constant 0 : index
    %c0_4 = arith.constant 0 : index
    %9 = vector.load %arg2[%c0_3, %c0_4] : memref<384x128xbf16, #tpu.memory_space<vmem>>, vector<384x128xbf16>
    %cst_5 = arith.constant dense<0.000000e+00> : vector<16x128xf32>
    %10 = tpu.matmul %8, %9, %cst_5 {dimension_numbers = #tpu.dot_dimension_numbers<[1], [0], [0], [1], [0, 0, 1, 1], [], []>} : vector<16x384xbf16>, vector<384x128xbf16>, vector<16x128xf32> -> vector<16x128xf32>
    %c0_6 = arith.constant 0 : index
    %c0_7 = arith.constant 0 : index
    %11 = vector.load %arg3[%c0_6, %c0_7] : memref<1x128xf32, #tpu.memory_space<vmem>>, vector<1x128xf32>
    %12 = vector.broadcast %11 : vector<1x128xf32> to vector<16x128xf32>
    %13 = arith.addf %10, %12 : vector<16x128xf32>
    %14 = arith.negf %13 : vector<16x128xf32>
    %15 = math.exp %14 : vector<16x128xf32>
    %cst_8 = arith.constant 1.000000e+00 : f32
    %16 = vector.broadcast %cst_8 : f32 to vector<16x128xf32>
    %17 = arith.addf %16, %15 : vector<16x128xf32>
    %18 = arith.divf %16, %17 : vector<16x128xf32>
    %19 = arith.mulf %13, %18 : vector<16x128xf32>
    %20 = arith.truncf %19 : vector<16x128xf32> to vector<16x128xbf16>
    %cst_9 = arith.constant 0.000000e+00 : bf16
    %21 = vector.broadcast %cst_9 : bf16 to vector<1x128xbf16>
    %22 = vector.extract_strided_slice %20 {offsets = [0, 0], sizes = [15, 128], strides = [1, 1]} : vector<16x128xbf16> to vector<15x128xbf16>
    %23 = tpu.concatenate %21, %22 in 0 : vector<1x128xbf16>, vector<15x128xbf16> -> vector<16x128xbf16>
    %24 = vector.extract_strided_slice %20 {offsets = [1, 0], sizes = [15, 128], strides = [1, 1]} : vector<16x128xbf16> to vector<15x128xbf16>
    %cst_10 = arith.constant 0.000000e+00 : bf16
    %25 = vector.broadcast %cst_10 : bf16 to vector<1x128xbf16>
    %26 = tpu.concatenate %24, %25 in 0 : vector<15x128xbf16>, vector<1x128xbf16> -> vector<16x128xbf16>
    %27 = tpu.concatenate %23, %20, %26 in 1 : vector<16x128xbf16>, vector<16x128xbf16>, vector<16x128xbf16> -> vector<16x384xbf16>
    %c0_11 = arith.constant 0 : index
    %c0_12 = arith.constant 0 : index
    %28 = vector.load %arg4[%c0_11, %c0_12] : memref<384x128xbf16, #tpu.memory_space<vmem>>, vector<384x128xbf16>
    %cst_13 = arith.constant dense<0.000000e+00> : vector<16x128xf32>
    %29 = tpu.matmul %27, %28, %cst_13 {dimension_numbers = #tpu.dot_dimension_numbers<[1], [0], [0], [1], [0, 0, 1, 1], [], []>} : vector<16x384xbf16>, vector<384x128xbf16>, vector<16x128xf32> -> vector<16x128xf32>
    %c0_14 = arith.constant 0 : index
    %c0_15 = arith.constant 0 : index
    %30 = vector.load %arg5[%c0_14, %c0_15] : memref<1x128xf32, #tpu.memory_space<vmem>>, vector<1x128xf32>
    %31 = vector.broadcast %30 : vector<1x128xf32> to vector<16x128xf32>
    %32 = arith.addf %29, %31 : vector<16x128xf32>
    %33 = arith.negf %32 : vector<16x128xf32>
    %34 = math.exp %33 : vector<16x128xf32>
    %cst_16 = arith.constant 1.000000e+00 : f32
    %35 = vector.broadcast %cst_16 : f32 to vector<16x128xf32>
    %36 = arith.addf %35, %34 : vector<16x128xf32>
    %37 = arith.divf %35, %36 : vector<16x128xf32>
    %38 = arith.mulf %32, %37 : vector<16x128xf32>
    %39 = arith.extf %1 : vector<16x128xbf16> to vector<16x128xf32>
    %40 = arith.addf %38, %39 : vector<16x128xf32>
    %41 = arith.truncf %40 : vector<16x128xf32> to vector<16x128xbf16>
    %42 = vector.shape_cast %41 : vector<16x128xbf16> to vector<1x16x128xbf16>
    %c0_17 = arith.constant 0 : index
    %c0_18 = arith.constant 0 : index
    %c0_19 = arith.constant 0 : index
    %43 = vector.load %arg6[%c0_17, %c0_18, %c0_19] : memref<1x16x128xbf16, #tpu.memory_space<vmem>>, vector<1x16x128xbf16>
    tpu.vector_store %arg6[%c0_17, %c0_18, %c0_19], %42 {strides = array<i32>} : memref<1x16x128xbf16, #tpu.memory_space<vmem>>, vector<1x16x128xbf16>,
    return
  }
  func.func @transform_0(%arg0: i32) -> (i32, i32, i32) {
    %c0_i32 = arith.constant 0 : i32
    %c0_i32_0 = arith.constant 0 : i32
    %c0_i32_1 = arith.constant 0 : i32
    return %arg0, %c0_i32, %c0_i32_0 : i32, i32, i32
  }
  func.func @transform_1(%arg0: i32) -> (i32, i32) {
    %c0_i32 = arith.constant 0 : i32
    %c0_i32_0 = arith.constant 0 : i32
    %c0_i32_1 = arith.constant 0 : i32
    return %c0_i32, %c0_i32_0 : i32, i32
  }
  func.func @transform_2(%arg0: i32) -> (i32, i32) {
    %c0_i32 = arith.constant 0 : i32
    %c0_i32_0 = arith.constant 0 : i32
    %c0_i32_1 = arith.constant 0 : i32
    return %c0_i32, %c0_i32_0 : i32, i32
  }
  func.func @transform_3(%arg0: i32) -> (i32, i32) {
    %c0_i32 = arith.constant 0 : i32
    %c0_i32_0 = arith.constant 0 : i32
    %c0_i32_1 = arith.constant 0 : i32
    return %c0_i32, %c0_i32_0 : i32, i32
  }
  func.func @transform_4(%arg0: i32) -> (i32, i32) {
    %c0_i32 = arith.constant 0 : i32
    %c0_i32_0 = arith.constant 0 : i32
    %c0_i32_1 = arith.constant 0 : i32
    return %c0_i32, %c0_i32_0 : i32, i32
  }
  func.func @transform_5(%arg0: i32) -> (i32, i32, i32) {
    %c0_i32 = arith.constant 0 : i32
    %c0_i32_0 = arith.constant 0 : i32
    %c0_i32_1 = arith.constant 0 : i32
    return %arg0, %c0_i32, %c0_i32_0 : i32, i32, i32
  }
}

</mosaic_0001>

<llo_original>
// kernel: tpu_custom_call.1
$region0: #{tpu_custom_call.1}
  #allocation0 [shape = 'u32[]', space=smem, size = 0x4, offset = 0x4, fixed_abs, tag = 'smem constant byte address 0x4 - core index']
  #allocation1 [shape = 'u32[144,128]{1,0:T(1,128)}', space=vmem, size = 0x12000, scoped, tag = 'internal scratch']
  %s0 = inlined_call_operand.hbm [shape: bf16[2,16,128], index: 0, kind: input, shape index: {}]
  %s1 = inlined_call_operand.hbm [shape: bf16[384,128], index: 1, kind: input, shape index: {}]
  %s2 = inlined_call_operand.vmem [shape: f32[1,128], index: 2, kind: input, shape index: {}]
  %s3 = inlined_call_operand.hbm [shape: bf16[384,128], index: 3, kind: input, shape index: {}]
  %s4 = inlined_call_operand.vmem [shape: f32[1,128], index: 4, kind: input, shape index: {}]
  %s5 = inlined_call_operand.hbm [shape: bf16[2,16,128], index: 5, kind: output, shape index: {}]
  %s6 = sld [smem:[#allocation0]]
  $region65: #{tpu_custom_call.1} parent=0
    _
  %s8 = ssub.s32 1, %s6
  %s9 = scalar_select 0, %s8, %s6
  $region1: #{tpu_custom_call.1} parent=0
    #allocation2 [shape = 'u8[8192]{0}', space=vmem, size = 0x2000, scoped, tag = 'input window, operand 0']
    #allocation3 [shape = 's32[2]{0}', space=sflag, size = 0x8, scoped, tag = 'scoped memory for tpu_custom_call.1']
    #allocation4 [shape = 's32[2]{0}', space=sflag, size = 0x8, scoped, tag = 'scoped memory for tpu_custom_call.1']
    #allocation5 [shape = 'u8[98304]{0}', space=vmem, size = 0x18000, scoped, tag = 'input window, operand 1, single buffered']
    #allocation6 [shape = 's32[1]{0}', space=sflag, size = 0x4, scoped, tag = 'scoped memory for tpu_custom_call.1']
    #allocation7 [shape = 'u8[98304]{0}', space=vmem, size = 0x18000, scoped, tag = 'input window, operand 3, single buffered']
    #allocation8 [shape = 'u8[8192]{0}', space=vmem, size = 0x2000, scoped, tag = 'output window, operand 0']
    %10 = vsyncpa [#allocation3], 0
    %s11 = scalar_lea.sflag [#allocation3], 1
    %12 = vsyncpa %s11, 0
    %13 = vsyncpa [#allocation6], 0
    %14 = vsyncpa [#allocation4], 0
    %s15 = scalar_lea.sflag [#allocation4], 1
    %16 = vsyncpa %s15, 0
    loop: start=0, step=1, limit=4
    $region2: #{tpu_custom_call.1} parent=1 // loop_pre_header
      _
    $region3: #{tpu_custom_call.1} parent=1 // loop_header
      %s18 = sphi 0, %s22
      %p19 = scmp.ge.s32.totalorder %s18, 4
      %s28 = sphi 0, %s30
      %s31 = sphi 0, %s28
      %s32 = sphi 0, %s31
      %s48 = sphi 0, %s32
      %s52 = sphi 0, %s52
      %s54 = sphi 0, %s52
      %s55 = sphi 0, %s54
      %s69 = sphi 0, %s55
      %s73 = sphi 0, %s73
      %s75 = sphi 0, %s73
      %s76 = sphi 0, %s75
      %s90 = sphi 0, %s76
      %s94 = sphi 0, %s94
      %s96 = sphi 0, %s94
      %s97 = sphi 0, %s96
      %s111 = sphi 0, %s97
      %s115 = sphi 0, %s115
      %s117 = sphi 0, %s115
      %s118 = sphi 0, %s117
      %s132 = sphi 0, %s118
      %s138 = sphi 0, %s140
      %s141 = sphi 0, %s138
      %s142 = sphi 0, %s141
      %s158 = sphi 0, %s142
    $region4: #{tpu_custom_call.1} parent=1 // loop_header_branch
      %21 = sbr.rel (%p19) target = $region8
    $region5: #{tpu_custom_call.1} parent=1 // loop_body
      %s23 = ssub.s32 %s18, 1
      %s24 = ssub.s32 %s18, 2
      %s25 = sadd.s32 %s18, 1
      %s26 = ssub.s32 %s18, %s25
      %p27 = scmp.eq.s32.totalorder %s26, 0
      %s29 = sadd.s32 %s28, 1
      %s30 = scalar_select %p27, %s28, %s29
      %p33 = pneg %p27
      %p34 = scmp.eq.s32.totalorder %s18, 1
      %p35 = por %p33, %p34
      %p36 = scmp.ne.s32.totalorder %s28, %s31
      %p37 = scmp.eq.s32.totalorder %s18, 0
      %p38 = por %p36, %p37
      %p39 = scmp.ne.s32.totalorder %s28, %s31
      %p40 = scmp.eq.s32.totalorder %s23, 1
      %p41 = por %p39, %p40
      %p42 = scmp.ne.s32.totalorder %s31, %s32
      %p43 = scmp.eq.s32.totalorder %s23, 0
      %p44 = por %p42, %p43
      %p45 = scmp.ne.s32.totalorder %s31, %s32
      %p46 = scmp.eq.s32.totalorder %s24, 1
      %p47 = por %p45, %p46
      %p49 = scmp.ne.s32.totalorder %s32, %s48
      %p50 = scmp.eq.s32.totalorder %s24, 0
      %p51 = por %p49, %p50
      %s53 = sadd.s32 %s52, 1
      %p56 = scmp.eq.s32.totalorder %s18, 1
      %p57 = scmp.ne.s32.totalorder %s52, %s54
      %p58 = scmp.eq.s32.totalorder %s18, 0
      %p59 = por %p57, %p58
      %p60 = scmp.ne.s32.totalorder %s52, %s54
      %p61 = scmp.eq.s32.totalorder %s23, 1
      %p62 = por %p60, %p61
      %p63 = scmp.ne.s32.totalorder %s54, %s55
      %p64 = scmp.eq.s32.totalorder %s23, 0
      %p65 = por %p63, %p64
      %p66 = scmp.ne.s32.totalorder %s54, %s55
      %p67 = scmp.eq.s32.totalorder %s24, 1
      %p68 = por %p66, %p67
      %p70 = scmp.ne.s32.totalorder %s55, %s69
      %p71 = scmp.eq.s32.totalorder %s24, 0
      %p72 = por %p70, %p71
      %s74 = sadd.s32 %s73, 1
      %p77 = scmp.eq.s32.totalorder %s18, 1
      %p78 = scmp.ne.s32.totalorder %s73, %s75
      %p79 = scmp.eq.s32.totalorder %s18, 0
      %p80 = por %p78, %p79
      %p81 = scmp.ne.s32.totalorder %s73, %s75
      %p82 = scmp.eq.s32.totalorder %s23, 1
      %p83 = por %p81, %p82
      %p84 = scmp.ne.s32.totalorder %s75, %s76
      %p85 = scmp.eq.s32.totalorder %s23, 0
      %p86 = por %p84, %p85
      %p87 = scmp.ne.s32.totalorder %s75, %s76
      %p88 = scmp.eq.s32.totalorder %s24, 1
      %p89 = por %p87, %p88
      %p91 = scmp.ne.s32.totalorder %s76, %s90
      %p92 = scmp.eq.s32.totalorder %s24, 0
      %p93 = por %p91, %p92
      %s95 = sadd.s32 %s94, 1
      %p98 = scmp.eq.s32.totalorder %s18, 1
      %p99 = scmp.ne.s32.totalorder %s94, %s96
      %p100 = scmp.eq.s32.totalorder %s18, 0
      %p101 = por %p99, %p100
      %p102 = scmp.ne.s32.totalorder %s94, %s96
      %p103 = scmp.eq.s32.totalorder %s23, 1
      %p104 = por %p102, %p103
      %p105 = scmp.ne.s32.totalorder %s96, %s97
      %p106 = scmp.eq.s32.totalorder %s23, 0
      %p107 = por %p105, %p106
      %p108 = scmp.ne.s32.totalorder %s96, %s97
      %p109 = scmp.eq.s32.totalorder %s24, 1
      %p110 = por %p108, %p109
      %p112 = scmp.ne.s32.totalorder %s97, %s111
      %p113 = scmp.eq.s32.totalorder %s24, 0
      %p114 = por %p112, %p113
      %s116 = sadd.s32 %s115, 1
      %p119 = scmp.eq.s32.totalorder %s18, 1
      %p120 = scmp.ne.s32.totalorder %s115, %s117
      %p121 = scmp.eq.s32.totalorder %s18, 0
      %p122 = por %p120, %p121
      %p123 = scmp.ne.s32.totalorder %s115, %s117
      %p124 = scmp.eq.s32.totalorder %s23, 1
      %p125 = por %p123, %p124
      %p126 = scmp.ne.s32.totalorder %s117, %s118
      %p127 = scmp.eq.s32.totalorder %s23, 0
      %p128 = por %p126, %p127
      %p129 = scmp.ne.s32.totalorder %s117, %s118
      %p130 = scmp.eq.s32.totalorder %s24, 1
      %p131 = por %p129, %p130
      %p133 = scmp.ne.s32.totalorder %s118, %s132
      %p134 = scmp.eq.s32.totalorder %s24, 0
      %p135 = por %p133, %p134
      %s136 = ssub.s32 %s18, %s25
      %p137 = scmp.eq.s32.totalorder %s136, 0
      %s139 = sadd.s32 %s138, 1
      %s140 = scalar_select %p137, %s138, %s139
      %p143 = pneg %p137
      %p144 = scmp.eq.s32.totalorder %s18, 1
      %p145 = por %p143, %p144
      %p146 = scmp.ne.s32.totalorder %s138, %s141
      %p147 = scmp.eq.s32.totalorder %s18, 0
      %p148 = por %p146, %p147
      %p149 = scmp.ne.s32.totalorder %s138, %s141
      %p150 = scmp.eq.s32.totalorder %s23, 1
      %p151 = por %p149, %p150
      %p152 = scmp.ne.s32.totalorder %s141, %s142
      %p153 = scmp.eq.s32.totalorder %s23, 0
      %p154 = por %p152, %p153
      %p155 = scmp.ne.s32.totalorder %s141, %s142
      %p156 = scmp.eq.s32.totalorder %s24, 1
      %p157 = por %p155, %p156
      %p159 = scmp.ne.s32.totalorder %s142, %s158
      %p160 = scmp.eq.s32.totalorder %s24, 0
      %p161 = por %p159, %p160
      %p162 = scmp.le.s32.totalorder 1, %s18
      %p163 = scmp.lt.s32.totalorder %s18, 3
      %p164 = pnand %p162, %p163
      %p165 = pneg %p164
      // Predicated region
      $region9: #{tpu_custom_call.1} parent=5 // pred_check
        _
      $region10: #{tpu_custom_call.1} parent=5 // pred_check_branch
        %167 = sbr.rel (%p164) target = $region12
      $region11: #{tpu_custom_call.1} parent=5 // pred_region
        %s168 = ssub.s32 %s18, 1
        // Predicated region
        $region13: #{tpu_custom_call.1} parent=11 // pred_check
          %p169 = pneg %p65
        $region14: #{tpu_custom_call.1} parent=11 // pred_check_branch
          %171 = sbr.rel (%p169) target = $region16
        $region15: #{tpu_custom_call.1} parent=11 // pred_region
          %s173 = ssub.s32 3072, 3072
          %174 = vsyncadd [#allocation6], %s173
          %s175 = sshll.u32 [#allocation5], 4
          %s176 = int_to_ptr.vmem [resolvable:$true] %s175
          %181 = dma.hbm_to_vmem [thread:$0]  %s1, 3072, %s176, [#allocation6], 64, 64, 4
        $region16: #{tpu_custom_call.1} parent=11 // pred_fallthru
          _
        // Predicated region
        $region17: #{tpu_custom_call.1} parent=11 // pred_check
          %p182 = pneg %p86
        $region18: #{tpu_custom_call.1} parent=11 // pred_check_branch
          %184 = sbr.rel (%p182) target = $region20
        $region19: #{tpu_custom_call.1} parent=11 // pred_region
          _
        $region20: #{tpu_custom_call.1} parent=11 // pred_fallthru
          _
        // Predicated region
        $region21: #{tpu_custom_call.1} parent=11 // pred_check
          %p185 = pneg %p107
        $region22: #{tpu_custom_call.1} parent=11 // pred_check_branch
          %187 = sbr.rel (%p185) target = $region24
        $region23: #{tpu_custom_call.1} parent=11 // pred_region
          %s189 = ssub.s32 3072, 3072
          %190 = vsyncadd [#allocation6], %s189
          %s191 = sshll.u32 [#allocation7], 4
          %s192 = int_to_ptr.vmem [resolvable:$true] %s191
          %197 = dma.hbm_to_vmem [thread:$0]  %s3, 3072, %s192, [#allocation6], 64, 64, 4
        $region24: #{tpu_custom_call.1} parent=11 // pred_fallthru
          _
        // Predicated region
        $region25: #{tpu_custom_call.1} parent=11 // pred_check
          %p198 = pneg %p128
        $region26: #{tpu_custom_call.1} parent=11 // pred_check_branch
          %200 = sbr.rel (%p198) target = $region28
        $region27: #{tpu_custom_call.1} parent=11 // pred_region
          _
        $region28: #{tpu_custom_call.1} parent=11 // pred_fallthru
          _
      $region12: #{tpu_custom_call.1} parent=5 // pred_fallthru
        _
      %p201 = scmp.lt.s32.totalorder %s18, 2
      // Predicated region
      $region29: #{tpu_custom_call.1} parent=5 // pred_check
        %p202 = pneg %p201
      $region30: #{tpu_custom_call.1} parent=5 // pred_check_branch
        %204 = sbr.rel (%p202) target = $region32
      $region31: #{tpu_custom_call.1} parent=5 // pred_region
        // Predicated region
        $region33: #{tpu_custom_call.1} parent=31 // pred_check
          %p205 = pneg %p38
        $region34: #{tpu_custom_call.1} parent=31 // pred_check_branch
          %207 = sbr.rel (%p205) target = $region36
        $region35: #{tpu_custom_call.1} parent=31 // pred_region
          %s208 = sand.u32 %s28, 1
          %s209 = scalar_lea.sflag [#allocation3], %s208
          %s210 = sand.u32 %s28, 1
          %s211 = smul.addr %s210, 8
          %s212 = scalar_lea.vmem [#allocation2], %s211
          %s214 = ssub.s32 128, 128
          %215 = vsyncadd %s209, %s214
          %s216 = smul.addr %s18, 2
          %s217 = smul.addr %s216, 64
          %s218 = scalar_lea.hbm %s0, %s217
          %s219 = sshll.u32 %s212, 4
          %s220 = int_to_ptr.vmem [resolvable:$true] %s219
          %225 = dma.hbm_to_vmem [thread:$0]  %s218, 128, %s220, %s209, 64, 64, 4
        $region36: #{tpu_custom_call.1} parent=31 // pred_fallthru
          _
      $region32: #{tpu_custom_call.1} parent=5 // pred_fallthru
        _
      %p226 = scmp.le.s32.totalorder 1, %s18
      %p227 = scmp.lt.s32.totalorder %s18, 3
      %p228 = pnand %p226, %p227
      %p229 = pneg %p228
      // Predicated region
      $region37: #{tpu_custom_call.1} parent=5 // pred_check
        _
      $region38: #{tpu_custom_call.1} parent=5 // pred_check_branch
        %231 = sbr.rel (%p228) target = $region40
      $region39: #{tpu_custom_call.1} parent=5 // pred_region
        %s232 = ssub.s32 %s18, 1
        %s233 = sand.u32 %s31, 1
        %s234 = scalar_lea.sflag [#allocation3], %s233
        %s235 = sand.u32 %s31, 1
        %s236 = smul.addr %s235, 8
        %s237 = scalar_lea.vmem [#allocation2], %s236
        // Predicated region
        $region41: #{tpu_custom_call.1} parent=39 // pred_check
          %p238 = pneg %p44
        $region42: #{tpu_custom_call.1} parent=39 // pred_check_branch
          %240 = sbr.rel (%p238) target = $region44
        $region43: #{tpu_custom_call.1} parent=39 // pred_region
          %241 = dma.done %s234, 128
        $region44: #{tpu_custom_call.1} parent=39 // pred_fallthru
          _
        // Predicated region
        $region45: #{tpu_custom_call.1} parent=39 // pred_check
          %p242 = pneg %p65
        $region46: #{tpu_custom_call.1} parent=39 // pred_check_branch
          %244 = sbr.rel (%p242) target = $region48
        $region47: #{tpu_custom_call.1} parent=39 // pred_region
          %245 = dma.done [#allocation6], 3072
        $region48: #{tpu_custom_call.1} parent=39 // pred_fallthru
          _
        // Predicated region
        $region49: #{tpu_custom_call.1} parent=39 // pred_check
          %p246 = pneg %p107
        $region50: #{tpu_custom_call.1} parent=39 // pred_check_branch
          %248 = sbr.rel (%p246) target = $region52
        $region51: #{tpu_custom_call.1} parent=39 // pred_region
          %249 = dma.done [#allocation6], 3072
        $region52: #{tpu_custom_call.1} parent=39 // pred_fallthru
          _
        %s250 = sand.u32 %s31, 1
        %s251 = scalar_lea.sflag [#allocation3], %s250
        %s252 = sand.u32 %s31, 1
        %s253 = smul.addr %s252, 8
        %s254 = scalar_lea.vmem [#allocation2], %s253
        %p255 = pneg %p44
        %p256 = pneg %p41
        %p257 = pneg %p65
        %p258 = pneg %p62
        %p259 = pneg %p86
        %p260 = pneg %p83
        %p261 = pneg %p107
        %p262 = pneg %p104
        %p263 = pneg %p128
        %p264 = pneg %p125
        %p265 = pneg %p154
        %p266 = pneg %p151
        %s267 = sand.u32 %s141, 1
        %s268 = scalar_lea.sflag [#allocation4], %s267
        %s269 = sand.u32 %s141, 1
        %s270 = smul.addr %s269, 8
        %s271 = scalar_lea.vmem [#allocation8], %s270
        %v273 = vld [vmem:[%s237] sm:$0xf]
        %v274 = vld [vmem:[%s237 + $0x4] sm:$0xf]
        %v277 = vunpack.c.l.b16 %v273
        %v278 = vunpack.c.l.b16 %v274
        %v279 = vpack.c.b16 %v278, %v277
        %v281 = vshrl.u32 %v279, 16
        %v283 = vrot.slane %v281, 7
        %v284 = vshll.u32 %v279, 16
        %v286 = vor.u32 %v283, %v284
        %vm288 = vcmask 1040384
        %vm289 = vsmask.f32 256
        %vm290 = vmand %vm288, %vm289
        %v291 = vsel %vm290, 0, %v286
        %v292 = vrot.slane %v284, 1
        %v293 = vor.u32 %v281, %v292
        %vm295 = vcmask 1047552
        %vm296 = vsmask.f32 7424
        %vm297 = vmand %vm295, %vm296
        %v298 = vsel %vm297, %v293, 0
        %v300 = vld [vmem:[#allocation5] sm:$0xf]
        %v301 = vld [vmem:[#allocation5 + $0x4] sm:$0xf]
        %v302 = vld [vmem:[#allocation5 + $0x8] sm:$0xf]
        %v303 = vld [vmem:[#allocation5 + $0xc] sm:$0xf]
        %v304 = vld [vmem:[#allocation5 + $0x10] sm:$0xf]
        %v305 = vld [vmem:[#allocation5 + $0x14] sm:$0xf]
        %v306 = vld [vmem:[#allocation5 + $0x18] sm:$0xf]
        %v307 = vld [vmem:[#allocation5 + $0x1c] sm:$0xf]
        %v308 = vld [vmem:[#allocation5 + $0x20] sm:$0xf]
        %v309 = vld [vmem:[#allocation5 + $0x24] sm:$0xf]
        %v310 = vld [vmem:[#allocation5 + $0x28] sm:$0xf]
        %v311 = vld [vmem:[#allocation5 + $0x2c] sm:$0xf]
        %v312 = vld [vmem:[#allocation5 + $0x30] sm:$0xf]
        %v313 = vld [vmem:[#allocation5 + $0x34] sm:$0xf]
        %v314 = vld [vmem:[#allocation5 + $0x38] sm:$0xf]
        %v315 = vld [vmem:[#allocation5 + $0x3c] sm:$0xf]
        %v316 = vld [vmem:[#allocation5 + $0x40] sm:$0xf]
        %v317 = vld [vmem:[#allocation5 + $0x44] sm:$0xf]
        %v318 = vld [vmem:[#allocation5 + $0x48] sm:$0xf]
        %v319 = vld [vmem:[#allocation5 + $0x4c] sm:$0xf]
        %v320 = vld [vmem:[#allocation5 + $0x50] sm:$0xf]
        %v321 = vld [vmem:[#allocation5 + $0x54] sm:$0xf]
        %v322 = vld [vmem:[#allocation5 + $0x58] sm:$0xf]
        %v323 = vld [vmem:[#allocation5 + $0x5c] sm:$0xf]
        %v324 = vld [vmem:[#allocation5 + $0x60] sm:$0xf]
        %v325 = vld [vmem:[#allocation5 + $0x64] sm:$0xf]
        %v326 = vld [vmem:[#allocation5 + $0x68] sm:$0xf]
        %v327 = vld [vmem:[#allocation5 + $0x6c] sm:$0xf]
        %v328 = vld [vmem:[#allocation5 + $0x70] sm:$0xf]
        %v329 = vld [vmem:[#allocation5 + $0x74] sm:$0xf]
        %v330 = vld [vmem:[#allocation5 + $0x78] sm:$0xf]
        %v331 = vld [vmem:[#allocation5 + $0x7c] sm:$0xf]
        %v332 = vld [vmem:[#allocation5 + $0x80] sm:$0xf]
        %v333 = vld [vmem:[#allocation5 + $0x84] sm:$0xf]
        %v334 = vld [vmem:[#allocation5 + $0x88] sm:$0xf]
        %v335 = vld [vmem:[#allocation5 + $0x8c] sm:$0xf]
        %v336 = vld [vmem:[#allocation5 + $0x90] sm:$0xf]
        %v337 = vld [vmem:[#allocation5 + $0x94] sm:$0xf]
        %v338 = vld [vmem:[#allocation5 + $0x98] sm:$0xf]
        %v339 = vld [vmem:[#allocation5 + $0x9c] sm:$0xf]
        %v340 = vld [vmem:[#allocation5 + $0xa0] sm:$0xf]
        %v341 = vld [vmem:[#allocation5 + $0xa4] sm:$0xf]
        %v342 = vld [vmem:[#allocation5 + $0xa8] sm:$0xf]
        %v343 = vld [vmem:[#allocation5 + $0xac] sm:$0xf]
        %v344 = vld [vmem:[#allocation5 + $0xb0] sm:$0xf]
        %v345 = vld [vmem:[#allocation5 + $0xb4] sm:$0xf]
        %v346 = vld [vmem:[#allocation5 + $0xb8] sm:$0xf]
        %v347 = vld [vmem:[#allocation5 + $0xbc] sm:$0xf]
        %v348 = vld [vmem:[%s2] sm:$0x1]
        %v350 = vlaneseq
        %v351 = vshrl.u32 %v350, 7
        %v352 = vsub.s32 0, %v351
        %v353 = vrot.slane %v348, %v352
        %v403 = vunpack.c.l.b16 %v300
        %v404 = vunpack.c.l.b16 %v301
        %v405 = vunpack.c.l.b16 %v302
        %v406 = vunpack.c.l.b16 %v303
        %v407 = vunpack.c.l.b16 %v304
        %v408 = vunpack.c.l.b16 %v305
        %v409 = vunpack.c.l.b16 %v306
        %v410 = vunpack.c.l.b16 %v307
        %v411 = vunpack.c.l.b16 %v308
        %v412 = vunpack.c.l.b16 %v309
        %v413 = vunpack.c.l.b16 %v310
        %v414 = vunpack.c.l.b16 %v311
        %v415 = vunpack.c.l.b16 %v312
        %v416 = vunpack.c.l.b16 %v313
        %v417 = vunpack.c.l.b16 %v314
        %v418 = vunpack.c.l.b16 %v315
        %v419 = vunpack.c.l.b16 %v316
        %v420 = vunpack.c.l.b16 %v317
        %v421 = vunpack.c.l.b16 %v318
        %v422 = vunpack.c.l.b16 %v319
        %v423 = vunpack.c.l.b16 %v320
        %v424 = vunpack.c.l.b16 %v321
        %v425 = vunpack.c.l.b16 %v322
        %v426 = vunpack.c.l.b16 %v323
        %v427 = vunpack.c.l.b16 %v324
        %v428 = vunpack.c.l.b16 %v325
        %v429 = vunpack.c.l.b16 %v326
        %v430 = vunpack.c.l.b16 %v327
        %v431 = vunpack.c.l.b16 %v328
        %v432 = vunpack.c.l.b16 %v329
        %v433 = vunpack.c.l.b16 %v330
        %v434 = vunpack.c.l.b16 %v331
        %v435 = vunpack.c.l.b16 %v332
        %v436 = vunpack.c.l.b16 %v333
        %v437 = vunpack.c.l.b16 %v334
        %v438 = vunpack.c.l.b16 %v335
        %v439 = vunpack.c.l.b16 %v336
        %v440 = vunpack.c.l.b16 %v337
        %v441 = vunpack.c.l.b16 %v338
        %v442 = vunpack.c.l.b16 %v339
        %v443 = vunpack.c.l.b16 %v340
        %v444 = vunpack.c.l.b16 %v341
        %v445 = vunpack.c.l.b16 %v342
        %v446 = vunpack.c.l.b16 %v343
        %v447 = vunpack.c.l.b16 %v344
        %v448 = vunpack.c.l.b16 %v345
        %v449 = vunpack.c.l.b16 %v346
        %v450 = vunpack.c.l.b16 %v347
        %v451 = vpack.c.b16 %v404, %v403
        %v452 = vpack.c.b16 %v406, %v405
        %v453 = vpack.c.b16 %v408, %v407
        %v454 = vpack.c.b16 %v410, %v409
        %v455 = vpack.c.b16 %v412, %v411
        %v456 = vpack.c.b16 %v414, %v413
        %v457 = vpack.c.b16 %v416, %v415
        %v458 = vpack.c.b16 %v418, %v417
        %v459 = vpack.c.b16 %v420, %v419
        %v460 = vpack.c.b16 %v422, %v421
        %v461 = vpack.c.b16 %v424, %v423
        %v462 = vpack.c.b16 %v426, %v425
        %v463 = vpack.c.b16 %v428, %v427
        %v464 = vpack.c.b16 %v430, %v429
        %v465 = vpack.c.b16 %v432, %v431
        %v466 = vpack.c.b16 %v434, %v433
        %v467 = vpack.c.b16 %v436, %v435
        %v468 = vpack.c.b16 %v438, %v437
        %v469 = vpack.c.b16 %v440, %v439
        %v470 = vpack.c.b16 %v442, %v441
        %v471 = vpack.c.b16 %v444, %v443
        %v472 = vpack.c.b16 %v446, %v445
        %v473 = vpack.c.b16 %v448, %v447
        %v474 = vpack.c.b16 %v450, %v449
        %499 = vmatprep.subr.bf16.mxu0 0
        %500 = vmatpush1.bf16.msra.mxu0 %v451
        %501 = vmatprep.subr.bf16.mxu0 0
        %502 = vmatpush1.bf16.msra.mxu0 %v452
        %503 = vmatprep.subr.bf16.mxu0 0
        %504 = vmatpush1.bf16.msra.mxu0 %v453
        %505 = vmatprep.subr.bf16.mxu0 0
        %506 = vmatpush1.bf16.msra.mxu0 %v454
        %507 = vmatprep.subr.bf16.mxu0 0
        %508 = vmatpush1.bf16.msra.mxu0 %v455
        %509 = vmatprep.subr.bf16.mxu0 0
        %510 = vmatpush1.bf16.msra.mxu0 %v456
        %511 = vmatprep.subr.bf16.mxu0 0
        %512 = vmatpush1.bf16.msra.mxu0 %v457
        %513 = vmatprep.subr.bf16.mxu0 0
        %514 = vmatpush1.bf16.msra.mxu0 %v458
        %515 = vmatprep.subr.bf16.mxu0 0
        %516 = vmatpush1.bf16.msra.mxu0 %v459
        %517 = vmatprep.subr.bf16.mxu0 0
        %518 = vmatpush1.bf16.msra.mxu0 %v460
        %519 = vmatprep.subr.bf16.mxu0 0
        %520 = vmatpush1.bf16.msra.mxu0 %v461
        %521 = vmatprep.subr.bf16.mxu0 0
        %522 = vmatpush1.bf16.msra.mxu0 %v462
        %523 = vmatprep.subr.bf16.mxu0 0
        %524 = vmatpush1.bf16.msra.mxu0 %v463
        %525 = vmatprep.subr.bf16.mxu0 0
        %526 = vmatpush1.bf16.msra.mxu0 %v464
        %527 = vmatprep.subr.bf16.mxu0 0
        %528 = vmatpush1.bf16.msra.mxu0 %v465
        %529 = vmatprep.subr.bf16.mxu0 0
        %530 = vmatpush1.bf16.msra.mxu0 %v466
        %531 = vmatprep.mubr.bf16.mxu0 %v279
        %532 = vmatmul.mubr.bf16.gmra.mrb[0].mxu0 %v291
        %v533 = vpop.f32.mrb[0].mxu0
        %v534 = vadd.f32 %v353, %v533
        %v535 = vpop.f32.mrb[0].mxu0
        %v536 = vpop.f32.mrb[0].mxu0
        %v537 = vadd.f32 %v353, %v536
        %v538 = vpop.f32.mrb[0].mxu0
        %539 = vdwg.mxu0
        %540 = vmatprep.subr.bf16.mxu0 0
        %541 = vmatpush1.bf16.msra.mxu0 %v467
        %542 = vmatprep.subr.bf16.mxu0 0
        %543 = vmatpush1.bf16.msra.mxu0 %v468
        %544 = vmatprep.subr.bf16.mxu0 0
        %545 = vmatpush1.bf16.msra.mxu0 %v469
        %546 = vmatprep.subr.bf16.mxu0 0
        %547 = vmatpush1.bf16.msra.mxu0 %v470
        %548 = vmatprep.subr.bf16.mxu0 0
        %549 = vmatpush1.bf16.msra.mxu0 %v471
        %550 = vmatprep.subr.bf16.mxu0 0
        %551 = vmatpush1.bf16.msra.mxu0 %v472
        %552 = vmatprep.subr.bf16.mxu0 0
        %553 = vmatpush1.bf16.msra.mxu0 %v473
        %554 = vmatprep.subr.bf16.mxu0 0
        %555 = vmatpush1.bf16.msra.mxu0 %v474
        %556 = vmatprep.subr.bf16.mxu0 0
        %557 = vmatpush1.bf16.msra.mxu0 0
        %558 = vmatprep.subr.bf16.mxu0 0
        %559 = vmatpush1.bf16.msra.mxu0 0
        %560 = vmatprep.subr.bf16.mxu0 0
        %561 = vmatpush1.bf16.msra.mxu0 0
        %562 = vmatprep.subr.bf16.mxu0 0
        %563 = vmatpush1.bf16.msra.mxu0 0
        %564 = vmatprep.subr.bf16.mxu0 0
        %565 = vmatpush1.bf16.msra.mxu0 0
        %566 = vmatprep.subr.bf16.mxu0 0
        %567 = vmatpush1.bf16.msra.mxu0 0
        %568 = vmatprep.subr.bf16.mxu0 0
        %569 = vmatpush1.bf16.msra.mxu0 0
        %570 = vmatprep.subr.bf16.mxu0 0
        %571 = vmatpush1.bf16.msra.mxu0 0
        %572 = vmatprep.mubr.bf16.mxu0 0
        %573 = vmatmul.mubr.bf16.gmra.mrb[0].mxu0 %v298
        %v574 = vpop.f32.mrb[0].mxu0
        %v575 = vadd.f32 %v534, %v574
        %v576 = vpop.f32.mrb[0].mxu0
        %v577 = vpop.f32.mrb[0].mxu0
        %v578 = vadd.f32 %v537, %v577
        %v579 = vpop.f32.mrb[0].mxu0
        %580 = vdwg.mxu0
        %v581 = vxor.u32 %v575, 2147483648
        %v582 = vxor.u32 %v578, 2147483648
        %v583 = vmul.f32 %v581, 1.442695
        %v584 = vpow.pop %v583
        %v585 = vmul.f32 %v582, 1.442695
        %v586 = vpow.pop %v585
        %v587 = vadd.f32 %v584, 1.0
        %v588 = vadd.f32 %v586, 1.0
        %v589 = vrcp.pop %v587
        %v590 = vmul.f32 1.0, %v589
        %v591 = vrcp.pop %v588
        %v592 = vmul.f32 1.0, %v591
        %v593 = vmul.f32 %v575, %v590
        %v594 = vmul.f32 %v578, %v592
        %v595 = vpack.c.bf16 %v594, %v593
        %v597 = vshrl.u32 %v595, 16
        %v599 = vrot.slane %v597, 7
        %v600 = vshll.u32 %v595, 16
        %v602 = vor.u32 %v599, %v600
        %v604 = vsel %vm290, 0, %v602
        %v605 = vrot.slane %v600, 1
        %v606 = vor.u32 %v597, %v605
        %v608 = vsel %vm297, %v606, 0
        %v609 = vld [vmem:[#allocation7] sm:$0xf]
        %v610 = vld [vmem:[#allocation7 + $0x4] sm:$0xf]
        %v611 = vld [vmem:[#allocation7 + $0x8] sm:$0xf]
        %v612 = vld [vmem:[#allocation7 + $0xc] sm:$0xf]
        %v613 = vld [vmem:[#allocation7 + $0x10] sm:$0xf]
        %v614 = vld [vmem:[#allocation7 + $0x14] sm:$0xf]
        %v615 = vld [vmem:[#allocation7 + $0x18] sm:$0xf]
        %v616 = vld [vmem:[#allocation7 + $0x1c] sm:$0xf]
        %v617 = vld [vmem:[#allocation7 + $0x20] sm:$0xf]
        %v618 = vld [vmem:[#allocation7 + $0x24] sm:$0xf]
        %v619 = vld [vmem:[#allocation7 + $0x28] sm:$0xf]
        %v620 = vld [vmem:[#allocation7 + $0x2c] sm:$0xf]
        %v621 = vld [vmem:[#allocation7 + $0x30] sm:$0xf]
        %v622 = vld [vmem:[#allocation7 + $0x34] sm:$0xf]
        %v623 = vld [vmem:[#allocation7 + $0x38] sm:$0xf]
        %v624 = vld [vmem:[#allocation7 + $0x3c] sm:$0xf]
        %v625 = vld [vmem:[#allocation7 + $0x40] sm:$0xf]
        %v626 = vld [vmem:[#allocation7 + $0x44] sm:$0xf]
        %v627 = vld [vmem:[#allocation7 + $0x48] sm:$0xf]
        %v628 = vld [vmem:[#allocation7 + $0x4c] sm:$0xf]
        %v629 = vld [vmem:[#allocation7 + $0x50] sm:$0xf]
        %v630 = vld [vmem:[#allocation7 + $0x54] sm:$0xf]
        %v631 = vld [vmem:[#allocation7 + $0x58] sm:$0xf]
        %v632 = vld [vmem:[#allocation7 + $0x5c] sm:$0xf]
        %v633 = vld [vmem:[#allocation7 + $0x60] sm:$0xf]
        %v634 = vld [vmem:[#allocation7 + $0x64] sm:$0xf]
        %v635 = vld [vmem:[#allocation7 + $0x68] sm:$0xf]
        %v636 = vld [vmem:[#allocation7 + $0x6c] sm:$0xf]
        %v637 = vld [vmem:[#allocation7 + $0x70] sm:$0xf]
        %v638 = vld [vmem:[#allocation7 + $0x74] sm:$0xf]
        %v639 = vld [vmem:[#allocation7 + $0x78] sm:$0xf]
        %v640 = vld [vmem:[#allocation7 + $0x7c] sm:$0xf]
        %v641 = vld [vmem:[#allocation7 + $0x80] sm:$0xf]
        %v642 = vld [vmem:[#allocation7 + $0x84] sm:$0xf]
        %v643 = vld [vmem:[#allocation7 + $0x88] sm:$0xf]
        %v644 = vld [vmem:[#allocation7 + $0x8c] sm:$0xf]
        %v645 = vld [vmem:[#allocation7 + $0x90] sm:$0xf]
        %v646 = vld [vmem:[#allocation7 + $0x94] sm:$0xf]
        %v647 = vld [vmem:[#allocation7 + $0x98] sm:$0xf]
        %v648 = vld [vmem:[#allocation7 + $0x9c] sm:$0xf]
        %v649 = vld [vmem:[#allocation7 + $0xa0] sm:$0xf]
        %v650 = vld [vmem:[#allocation7 + $0xa4] sm:$0xf]
        %v651 = vld [vmem:[#allocation7 + $0xa8] sm:$0xf]
        %v652 = vld [vmem:[#allocation7 + $0xac] sm:$0xf]
        %v653 = vld [vmem:[#allocation7 + $0xb0] sm:$0xf]
        %v654 = vld [vmem:[#allocation7 + $0xb4] sm:$0xf]
        %v655 = vld [vmem:[#allocation7 + $0xb8] sm:$0xf]
        %v656 = vld [vmem:[#allocation7 + $0xbc] sm:$0xf]
        %v657 = vld [vmem:[%s4] sm:$0x1]
        %v659 = vlaneseq
        %v660 = vshrl.u32 %v659, 7
        %v661 = vsub.s32 0, %v660
        %v662 = vrot.slane %v657, %v661
        %v712 = vunpack.c.l.b16 %v609
        %v713 = vunpack.c.l.b16 %v610
        %v714 = vunpack.c.l.b16 %v611
        %v715 = vunpack.c.l.b16 %v612
        %v716 = vunpack.c.l.b16 %v613
        %v717 = vunpack.c.l.b16 %v614
        %v718 = vunpack.c.l.b16 %v615
        %v719 = vunpack.c.l.b16 %v616
        %v720 = vunpack.c.l.b16 %v617
        %v721 = vunpack.c.l.b16 %v618
        %v722 = vunpack.c.l.b16 %v619
        %v723 = vunpack.c.l.b16 %v620
        %v724 = vunpack.c.l.b16 %v621
        %v725 = vunpack.c.l.b16 %v622
        %v726 = vunpack.c.l.b16 %v623
        %v727 = vunpack.c.l.b16 %v624
        %v728 = vunpack.c.l.b16 %v625
        %v729 = vunpack.c.l.b16 %v626
        %v730 = vunpack.c.l.b16 %v627
        %v731 = vunpack.c.l.b16 %v628
        %v732 = vunpack.c.l.b16 %v629
        %v733 = vunpack.c.l.b16 %v630
        %v734 = vunpack.c.l.b16 %v631
        %v735 = vunpack.c.l.b16 %v632
        %v736 = vunpack.c.l.b16 %v633
        %v737 = vunpack.c.l.b16 %v634
        %v738 = vunpack.c.l.b16 %v635
        %v739 = vunpack.c.l.b16 %v636
        %v740 = vunpack.c.l.b16 %v637
        %v741 = vunpack.c.l.b16 %v638
        %v742 = vunpack.c.l.b16 %v639
        %v743 = vunpack.c.l.b16 %v640
        %v744 = vunpack.c.l.b16 %v641
        %v745 = vunpack.c.l.b16 %v642
        %v746 = vunpack.c.l.b16 %v643
        %v747 = vunpack.c.l.b16 %v644
        %v748 = vunpack.c.l.b16 %v645
        %v749 = vunpack.c.l.b16 %v646
        %v750 = vunpack.c.l.b16 %v647
        %v751 = vunpack.c.l.b16 %v648
        %v752 = vunpack.c.l.b16 %v649
        %v753 = vunpack.c.l.b16 %v650
        %v754 = vunpack.c.l.b16 %v651
        %v755 = vunpack.c.l.b16 %v652
        %v756 = vunpack.c.l.b16 %v653
        %v757 = vunpack.c.l.b16 %v654
        %v758 = vunpack.c.l.b16 %v655
        %v759 = vunpack.c.l.b16 %v656
        %v760 = vpack.c.b16 %v713, %v712
        %v761 = vpack.c.b16 %v715, %v714
        %v762 = vpack.c.b16 %v717, %v716
        %v763 = vpack.c.b16 %v719, %v718
        %v764 = vpack.c.b16 %v721, %v720
        %v765 = vpack.c.b16 %v723, %v722
        %v766 = vpack.c.b16 %v725, %v724
        %v767 = vpack.c.b16 %v727, %v726
        %v768 = vpack.c.b16 %v729, %v728
        %v769 = vpack.c.b16 %v731, %v730
        %v770 = vpack.c.b16 %v733, %v732
        %v771 = vpack.c.b16 %v735, %v734
        %v772 = vpack.c.b16 %v737, %v736
        %v773 = vpack.c.b16 %v739, %v738
        %v774 = vpack.c.b16 %v741, %v740
        %v775 = vpack.c.b16 %v743, %v742
        %v776 = vpack.c.b16 %v745, %v744
        %v777 = vpack.c.b16 %v747, %v746
        %v778 = vpack.c.b16 %v749, %v748
        %v779 = vpack.c.b16 %v751, %v750
        %v780 = vpack.c.b16 %v753, %v752
        %v781 = vpack.c.b16 %v755, %v754
        %v782 = vpack.c.b16 %v757, %v756
        %v783 = vpack.c.b16 %v759, %v758
        %808 = vmatprep.subr.bf16.mxu0 0
        %809 = vmatpush1.bf16.msra.mxu0 %v760
        %810 = vmatprep.subr.bf16.mxu0 0
        %811 = vmatpush1.bf16.msra.mxu0 %v761
        %812 = vmatprep.subr.bf16.mxu0 0
        %813 = vmatpush1.bf16.msra.mxu0 %v762
        %814 = vmatprep.subr.bf16.mxu0 0
        %815 = vmatpush1.bf16.msra.mxu0 %v763
        %816 = vmatprep.subr.bf16.mxu0 0
        %817 = vmatpush1.bf16.msra.mxu0 %v764
        %818 = vmatprep.subr.bf16.mxu0 0
        %819 = vmatpush1.bf16.msra.mxu0 %v765
        %820 = vmatprep.subr.bf16.mxu0 0
        %821 = vmatpush1.bf16.msra.mxu0 %v766
        %822 = vmatprep.subr.bf16.mxu0 0
        %823 = vmatpush1.bf16.msra.mxu0 %v767
        %824 = vmatprep.subr.bf16.mxu0 0
        %825 = vmatpush1.bf16.msra.mxu0 %v768
        %826 = vmatprep.subr.bf16.mxu0 0
        %827 = vmatpush1.bf16.msra.mxu0 %v769
        %828 = vmatprep.subr.bf16.mxu0 0
        %829 = vmatpush1.bf16.msra.mxu0 %v770
        %830 = vmatprep.subr.bf16.mxu0 0
        %831 = vmatpush1.bf16.msra.mxu0 %v771
        %832 = vmatprep.subr.bf16.mxu0 0
        %833 = vmatpush1.bf16.msra.mxu0 %v772
        %834 = vmatprep.subr.bf16.mxu0 0
        %835 = vmatpush1.bf16.msra.mxu0 %v773
        %836 = vmatprep.subr.bf16.mxu0 0
        %837 = vmatpush1.bf16.msra.mxu0 %v774
        %838 = vmatprep.subr.bf16.mxu0 0
        %839 = vmatpush1.bf16.msra.mxu0 %v775
        %840 = vmatprep.mubr.bf16.mxu0 %v595
        %841 = vmatmul.mubr.bf16.gmra.mrb[0].mxu0 %v604
        %v842 = vpop.f32.mrb[0].mxu0
        %v843 = vadd.f32 %v662, %v842
        %v844 = vpop.f32.mrb[0].mxu0
        %v845 = vpop.f32.mrb[0].mxu0
        %v846 = vadd.f32 %v662, %v845
        %v847 = vpop.f32.mrb[0].mxu0
        %848 = vdwg.mxu0
        %849 = vmatprep.subr.bf16.mxu0 0
        %850 = vmatpush1.bf16.msra.mxu0 %v776
        %851 = vmatprep.subr.bf16.mxu0 0
        %852 = vmatpush1.bf16.msra.mxu0 %v777
        %853 = vmatprep.subr.bf16.mxu0 0
        %854 = vmatpush1.bf16.msra.mxu0 %v778
        %855 = vmatprep.subr.bf16.mxu0 0
        %856 = vmatpush1.bf16.msra.mxu0 %v779
        %857 = vmatprep.subr.bf16.mxu0 0
        %858 = vmatpush1.bf16.msra.mxu0 %v780
        %859 = vmatprep.subr.bf16.mxu0 0
        %860 = vmatpush1.bf16.msra.mxu0 %v781
        %861 = vmatprep.subr.bf16.mxu0 0
        %862 = vmatpush1.bf16.msra.mxu0 %v782
        %863 = vmatprep.subr.bf16.mxu0 0
        %864 = vmatpush1.bf16.msra.mxu0 %v783
        %865 = vmatprep.subr.bf16.mxu0 0
        %866 = vmatpush1.bf16.msra.mxu0 0
        %867 = vmatprep.subr.bf16.mxu0 0
        %868 = vmatpush1.bf16.msra.mxu0 0
        %869 = vmatprep.subr.bf16.mxu0 0
        %870 = vmatpush1.bf16.msra.mxu0 0
        %871 = vmatprep.subr.bf16.mxu0 0
        %872 = vmatpush1.bf16.msra.mxu0 0
        %873 = vmatprep.subr.bf16.mxu0 0
        %874 = vmatpush1.bf16.msra.mxu0 0
        %875 = vmatprep.subr.bf16.mxu0 0
        %876 = vmatpush1.bf16.msra.mxu0 0
        %877 = vmatprep.subr.bf16.mxu0 0
        %878 = vmatpush1.bf16.msra.mxu0 0
        %879 = vmatprep.subr.bf16.mxu0 0
        %880 = vmatpush1.bf16.msra.mxu0 0
        %881 = vmatprep.mubr.bf16.mxu0 0
        %882 = vmatmul.mubr.bf16.gmra.mrb[0].mxu0 %v608
        %v883 = vpop.f32.mrb[0].mxu0
        %v884 = vadd.f32 %v843, %v883
        %v885 = vpop.f32.mrb[0].mxu0
        %v886 = vpop.f32.mrb[0].mxu0
        %v887 = vadd.f32 %v846, %v886
        %v888 = vpop.f32.mrb[0].mxu0
        %889 = vdwg.mxu0
        %v890 = vxor.u32 %v884, 2147483648
        %v891 = vxor.u32 %v887, 2147483648
        %v892 = vmul.f32 %v890, 1.442695
        %v893 = vpow.pop %v892
        %v894 = vmul.f32 %v891, 1.442695
        %v895 = vpow.pop %v894
        %v896 = vadd.f32 %v893, 1.0
        %v897 = vadd.f32 %v895, 1.0
        %v898 = vrcp.pop %v896
        %v899 = vmul.f32 1.0, %v898
        %v900 = vrcp.pop %v897
        %v901 = vmul.f32 1.0, %v900
        %v902 = vmul.f32 %v884, %v899
        %v903 = vmul.f32 %v887, %v901
        %v904 = vunpack.c.l.bf16 %v273
        %v905 = vunpack.c.l.bf16 %v274
        %v906 = vadd.f32 %v902, %v904
        %v907 = vadd.f32 %v903, %v905
        %v908 = vpack.c.bf16 %v907, %v906
        %v910 = vunpack.c.l.b16 %v908
        %v911 = vunpack.c.h.b16 %v908
        %v912 = vpack.c.b16 %v910, %v910
        %v913 = vpack.c.b16 %v911, %v911
        %916 = vst [vmem:[%s271] sm:$0xf] %v912
        %917 = vst [vmem:[%s271 + $0x4] sm:$0xf] %v913
        %s918 = sand.u32 %s141, 1
        %s919 = scalar_lea.sflag [#allocation4], %s918
        %s920 = sand.u32 %s141, 1
        %s921 = smul.addr %s920, 8
        %s922 = scalar_lea.vmem [#allocation8], %s921
        // Predicated region
        $region53: #{tpu_custom_call.1} parent=39 // pred_check
          %p923 = pneg %p151
        $region54: #{tpu_custom_call.1} parent=39 // pred_check_branch
          %925 = sbr.rel (%p923) target = $region56
        $region55: #{tpu_custom_call.1} parent=39 // pred_region
          %s927 = ssub.s32 128, 128
          %928 = vsyncadd %s919, %s927
          %s929 = smul.addr %s23, 2
          %s930 = smul.addr %s929, 64
          %s931 = scalar_lea.hbm %s5, %s930
          %s932 = sshll.u32 %s922, 4
          %s933 = int_to_ptr.vmem [resolvable:$true] %s932
          %938 = dma.vmem_to_hbm [thread:$0]  %s933, 128, %s931, %s919, 64, 64, 4
        $region56: #{tpu_custom_call.1} parent=39 // pred_fallthru
          _
      $region40: #{tpu_custom_call.1} parent=5 // pred_fallthru
        _
      %p939 = scmp.le.s32.totalorder 2, %s18
      // Predicated region
      $region57: #{tpu_custom_call.1} parent=5 // pred_check
        %p940 = pneg %p939
      $region58: #{tpu_custom_call.1} parent=5 // pred_check_branch
        %942 = sbr.rel (%p940) target = $region60
      $region59: #{tpu_custom_call.1} parent=5 // pred_region
        %s943 = ssub.s32 %s18, 2
        // Predicated region
        $region61: #{tpu_custom_call.1} parent=59 // pred_check
          %p944 = pneg %p157
        $region62: #{tpu_custom_call.1} parent=59 // pred_check_branch
          %946 = sbr.rel (%p944) target = $region64
        $region63: #{tpu_custom_call.1} parent=59 // pred_region
          %s947 = sand.u32 %s142, 1
          %s948 = scalar_lea.sflag [#allocation4], %s947
          %s949 = sand.u32 %s142, 1
          %s950 = smul.addr %s949, 8
          %s951 = scalar_lea.vmem [#allocation8], %s950
          %952 = dma.done %s948, 128
        $region64: #{tpu_custom_call.1} parent=59 // pred_fallthru
          _
      $region60: #{tpu_custom_call.1} parent=5 // pred_fallthru
        _
    $region6: #{tpu_custom_call.1} parent=1 // loop_footer
      %s22 = sadd.s32 1, %s18
    $region7: #{tpu_custom_call.1} parent=1 // loop_footer_branch
      %17 = sbr.rel target = $region3
    $region8: #{tpu_custom_call.1} parent=1 // loop_exit
      _
    %953 = vsyncpa [#allocation3], 1
    %s954 = scalar_lea.sflag [#allocation3], 1
    %955 = vsyncpa %s954, 1
    %956 = vsyncpa [#allocation6], 1
    %957 = vsyncpa [#allocation4], 1
    %s958 = scalar_lea.sflag [#allocation4], 1
    %959 = vsyncpa %s958, 1

</llo_original>
